<compile_context>
chip_gen: v5e
topology: v5e:2x2
jax: 0.10.0
libtpu: 0.0.40
codegen_flags: <defaults>
</compile_context>

<pallas_src>
import functools

import jax
import jax.numpy as jnp
import numpy as np
from jax.experimental import pallas as pl
from jax.experimental.pallas import tpu as pltpu

BN_EPS = 1e-5


# ----------------------------------------------------------------------------
# Phase decomposition of ConvTranspose2d(k=4, s=2, p=1):
#   out[2m+r, 2j+c, co] = sum_{dy,dx,ci} xpad[m+r+dy, j+c+dx, ci]
#                                        * w[ci, co, 3-r-2*dy, 3-c-2*dx]
# with xpad = x zero-padded by 1 on each spatial side.
# ----------------------------------------------------------------------------
def _phase_weights(w_t):
    """w_t: (Cin, Cout, 4, 4) -> wsub[r, c, dy, dx, ci, co]."""
    w_perm = jnp.transpose(w_t, (2, 3, 0, 1))              # (ky, kx, ci, co)
    sel = jnp.array([[3, 1], [2, 0]], dtype=jnp.int32)     # [phase, tap] -> kernel idx
    return w_perm[sel[:, None, :, None], sel[None, :, None, :]]   # (2,2,2,2,ci,co)


# ----------------------------------------------------------------------------
# Block 0: ConvTranspose2d(k=4, s=1, p=0) on a 1x1 map == matmul (MXU),
# with fused BatchNorm partial statistics.
# ----------------------------------------------------------------------------
def _fc_conv1_kernel(x_ref, w_ref, o_ref, ps_ref, pq_ref):
    res = jnp.dot(x_ref[...], w_ref[...], preferred_element_type=jnp.float32)
    o_ref[...] = res
    ps_ref[...] = jnp.sum(res, axis=0, keepdims=True)
    pq_ref[...] = jnp.sum(res * res, axis=0, keepdims=True)


def fc_conv1_pallas(x, w_t):
    N, Cin = x.shape
    Cout = w_t.shape[1]
    wmat = jnp.transpose(w_t, (0, 2, 3, 1)).reshape(Cin, 16 * Cout)  # (ci, ky*4+kx, co)
    out, ps, pq = pl.pallas_call(
        _fc_conv1_kernel,
        out_shape=(jax.ShapeDtypeStruct((N, 16 * Cout), jnp.float32),
                   jax.ShapeDtypeStruct((1, 16 * Cout), jnp.float32),
                   jax.ShapeDtypeStruct((1, 16 * Cout), jnp.float32)),
        grid=(1,),
        in_specs=[pl.BlockSpec((N, Cin), lambda i: (0, 0)),
                  pl.BlockSpec((Cin, 16 * Cout), lambda i: (0, 0))],
        out_specs=(pl.BlockSpec((N, 16 * Cout), lambda i: (0, 0)),
                   pl.BlockSpec((1, 16 * Cout), lambda i: (0, 0)),
                   pl.BlockSpec((1, 16 * Cout), lambda i: (0, 0))),
    )(x, wmat)
    x_nhwc = out.reshape(N, 4, 4, Cout)
    psum = ps.reshape(16, Cout).sum(axis=0)
    psq = pq.reshape(16, Cout).sum(axis=0)
    return x_nhwc, psum, psq


# ----------------------------------------------------------------------------
# Path S: phase-decomposed stride-2 transposed conv, NHWC, MXU einsums.
# Used for the small early layers (large channel counts, small spatial).
# Fused per-grid-step BatchNorm partial stats.
# ----------------------------------------------------------------------------
def _convT_s2_nhwc_kernel(w_ref, xp_ref, o_ref, ps_ref, pq_ref, *, Cout, ti, Wi):
    t = pl.program_id(1)
    row0 = pl.multiple_of(t * ti, ti)
    halves = []
    for r in (0, 1):
        cols = []
        for c in (0, 1):
            acc = jnp.zeros((ti, Wi, Cout), jnp.float32)
            for dy in (0, 1):
                for dx in (0, 1):
                    xs = xp_ref[0, pl.ds(row0 + r + dy, ti), pl.ds(c + dx, Wi), :]
                    acc = acc + jnp.einsum(
                        "hwi,io->hwo", xs, w_ref[(r * 2 + c) * 4 + dy * 2 + dx],
                        preferred_element_type=jnp.float32)
            cols.append(acc)
        # column interleave: (m, j, c, co) -> (m, 2j+c, co)
        halves.append(jnp.stack(cols, axis=2).reshape(ti, 2 * Wi, Cout))
    # row interleave: (m, r, x, co) -> (2m+r, x, co)
    full = jnp.stack(halves, axis=1).reshape(2 * ti, 2 * Wi, Cout)
    o_ref[0] = full
    ps_ref[0, 0, :] = jnp.sum(full, axis=(0, 1))
    pq_ref[0, 0, :] = jnp.sum(full * full, axis=(0, 1))


def convT_s2_nhwc(x, w_t):
    N, Hi, Wi, Cin = x.shape
    Cout = w_t.shape[1]
    xp = jax.lax.pad(x, jnp.float32(0.0),
                     ((0, 0, 0), (1, 1, 0), (1, 1, 0), (0, 0, 0)))
    wsub = _phase_weights(w_t).reshape(16, Cin, Cout)
    ti = min(Hi, 16)
    n_t = Hi // ti
    kernel = functools.partial(_convT_s2_nhwc_kernel, Cout=Cout, ti=ti, Wi=Wi)
    out, ps, pq = pl.pallas_call(
        kernel,
        out_shape=(jax.ShapeDtypeStruct((N, 2 * Hi, 2 * Wi, Cout), jnp.float32),
                   jax.ShapeDtypeStruct((N * n_t, 1, Cout), jnp.float32),
                   jax.ShapeDtypeStruct((N * n_t, 1, Cout), jnp.float32)),
        grid=(N, n_t),
        in_specs=[pl.BlockSpec((16, Cin, Cout), lambda n, t: (0, 0, 0)),
                  pl.BlockSpec((1, Hi + 2, Wi + 2, Cin), lambda n, t: (n, 0, 0, 0))],
        out_specs=(pl.BlockSpec((1, 2 * ti, 2 * Wi, Cout), lambda n, t: (n, t, 0, 0)),
                   pl.BlockSpec((1, 1, Cout), lambda n, t: (n * n_t + t, 0, 0)),
                   pl.BlockSpec((1, 1, Cout), lambda n, t: (n * n_t + t, 0, 0))),
        compiler_params=pltpu.CompilerParams(
            dimension_semantics=("parallel", "parallel")),
    )(wsub, xp)
    return out, ps.sum(axis=(0, 1)), pq.sum(axis=(0, 1))


# ----------------------------------------------------------------------------
# Path L: phase-decomposed stride-2 transposed conv, lane-dense NCHW layout
# (W on lanes), per-tap scalar weights in SMEM, fused BatchNorm partial stats.
# Used for the big late layers (tiny channel counts, W >= 128).
# ----------------------------------------------------------------------------
def _convT_s2_nchw_kernel(w_ref, xp_ref, o_ref, ps_ref, pq_ref, *, Cin, Cout, ti, Wi):
    t = pl.program_id(1)
    row0 = pl.multiple_of(t * ti, ti)

    def widx(r, c, dy, dx, ci, co):
        return ((((r * 2 + c) * 2 + dy) * 2 + dx) * Cin + ci) * Cout + co

    halves = {}
    for r in (0, 1):
        accs = [[jnp.zeros((ti, Wi), jnp.float32) for _ in range(Cout)],
                [jnp.zeros((ti, Wi), jnp.float32) for _ in range(Cout)]]
        for dy in (0, 1):
            for ci in range(Cin):
                rows = xp_ref[0, ci, pl.ds(row0 + r + dy, ti), :]      # (ti, Wi+2)
                sh = [rows[:, k:k + Wi] for k in (0, 1, 2)]            # column taps
                for c in (0, 1):
                    for dx in (0, 1):
                        xs = sh[c + dx]
                        for co in range(Cout):
                            accs[c][co] = (accs[c][co]
                                           + w_ref[widx(r, c, dy, dx, ci, co)] * xs)
        # column interleave: (m, j, c) -> (m, 2j+c)
        halves[r] = [jnp.stack([accs[0][co], accs[1][co]], axis=-1).reshape(ti, 2 * Wi)
                     for co in range(Cout)]

    for co in range(Cout):
        h0, h1 = halves[0][co], halves[1][co]
        # row interleave: (m, r, x) -> (2m+r, x); dense, unmasked lane stores
        o_ref[0, co] = jnp.stack([h0, h1], axis=1).reshape(2 * ti, 2 * Wi)
        ps_ref[0, co] = jnp.sum(h0, axis=0) + jnp.sum(h1, axis=0)
        pq_ref[0, co] = jnp.sum(h0 * h0, axis=0) + jnp.sum(h1 * h1, axis=0)


def convT_s2_nchw(x, w_t):
    N, Cin, Hi, Wi = x.shape
    Cout = w_t.shape[1]
    xp = jax.lax.pad(x, jnp.float32(0.0),
                     ((0, 0, 0), (0, 0, 0), (1, 1, 0), (1, 1, 0)))
    wflat = _phase_weights(w_t).reshape(-1)
    ti = min(Hi, 16)
    n_t = Hi // ti
    kernel = functools.partial(_convT_s2_nchw_kernel, Cin=Cin, Cout=Cout, ti=ti, Wi=Wi)
    out, ps, pq = pl.pallas_call(
        kernel,
        out_shape=(jax.ShapeDtypeStruct((N, Cout, 2 * Hi, 2 * Wi), jnp.float32),
                   jax.ShapeDtypeStruct((N * n_t, Cout, 2 * Wi), jnp.float32),
                   jax.ShapeDtypeStruct((N * n_t, Cout, 2 * Wi), jnp.float32)),
        grid=(N, n_t),
        in_specs=[pl.BlockSpec(memory_space=pltpu.MemorySpace.SMEM),
                  pl.BlockSpec((1, Cin, Hi + 2, Wi + 2), lambda n, t: (n, 0, 0, 0))],
        out_specs=(pl.BlockSpec((1, Cout, 2 * ti, 2 * Wi), lambda n, t: (n, 0, t, 0)),
                   pl.BlockSpec((1, Cout, 2 * Wi), lambda n, t: (n * n_t + t, 0, 0)),
                   pl.BlockSpec((1, Cout, 2 * Wi), lambda n, t: (n * n_t + t, 0, 0))),
        compiler_params=pltpu.CompilerParams(
            dimension_semantics=("parallel", "parallel")),
    )(wflat, xp)
    return out, ps.sum(axis=(0, 2)), pq.sum(axis=(0, 2))


# ----------------------------------------------------------------------------
# Fused per-channel BatchNorm affine + ReLU (NHWC and lane-dense NCHW variants).
# ----------------------------------------------------------------------------
def _affine_relu_nhwc_kernel(x_ref, s_ref, b_ref, o_ref):
    y = x_ref[0] * s_ref[0][None, None, :] + b_ref[0][None, None, :]
    o_ref[0] = jnp.maximum(y, 0.0)


def affine_relu_nhwc(x, scale, shift):
    N, H, W, C = x.shape
    th = min(H, 32)
    n_t = H // th
    return pl.pallas_call(
        _affine_relu_nhwc_kernel,
        out_shape=jax.ShapeDtypeStruct((N, H, W, C), jnp.float32),
        grid=(N, n_t),
        in_specs=[pl.BlockSpec((1, th, W, C), lambda n, t: (n, t, 0, 0)),
                  pl.BlockSpec((1, C), lambda n, t: (0, 0)),
                  pl.BlockSpec((1, C), lambda n, t: (0, 0))],
        out_specs=pl.BlockSpec((1, th, W, C), lambda n, t: (n, t, 0, 0)),
        compiler_params=pltpu.CompilerParams(
            dimension_semantics=("parallel", "parallel")),
    )(x, scale.reshape(1, C), shift.reshape(1, C))


def _affine_relu_nchw_kernel(s_ref, b_ref, x_ref, o_ref, *, C):
    for ci in range(C):
        o_ref[0, ci] = jnp.maximum(x_ref[0, ci] * s_ref[ci] + b_ref[ci], 0.0)


def affine_relu_nchw(x, scale, shift):
    N, C, H, W = x.shape
    th = min(H, 64)
    n_t = H // th
    return pl.pallas_call(
        functools.partial(_affine_relu_nchw_kernel, C=C),
        out_shape=jax.ShapeDtypeStruct((N, C, H, W), jnp.float32),
        grid=(N, n_t),
        in_specs=[pl.BlockSpec(memory_space=pltpu.MemorySpace.SMEM),
                  pl.BlockSpec(memory_space=pltpu.MemorySpace.SMEM),
                  pl.BlockSpec((1, C, th, W), lambda n, t: (n, 0, t, 0))],
        out_specs=pl.BlockSpec((1, C, th, W), lambda n, t: (n, 0, t, 0)),
        compiler_params=pltpu.CompilerParams(
            dimension_semantics=("parallel", "parallel")),
    )(scale, shift, x)


# ----------------------------------------------------------------------------
# Final fused kernel: last BatchNorm affine + ReLU + 1x1 conv + Tanh (NCHW).
# ----------------------------------------------------------------------------
def _final_1x1_tanh_kernel(s_ref, b_ref, w_ref, x_ref, o_ref, act_ref, *, Cin, Cout):
    for ci in range(Cin):
        act_ref[ci] = jnp.maximum(x_ref[0, ci] * s_ref[ci] + b_ref[ci], 0.0)
    for co in range(Cout):
        acc = act_ref[0] * w_ref[co]
        for ci in range(1, Cin):
            acc = acc + act_ref[ci] * w_ref[ci * Cout + co]
        o_ref[0, co] = jnp.tanh(acc)


def final_1x1_tanh(x, w_t, scale, shift):
    N, Cin, H, W = x.shape
    Cout = w_t.shape[1]
    wvec = w_t.reshape(-1)                       # (Cin*Cout,), ci-major / co-minor
    th = min(H, 64)
    n_t = H // th
    return pl.pallas_call(
        functools.partial(_final_1x1_tanh_kernel, Cin=Cin, Cout=Cout),
        out_shape=jax.ShapeDtypeStruct((N, Cout, H, W), jnp.float32),
        grid=(N, n_t),
        in_specs=[pl.BlockSpec(memory_space=pltpu.MemorySpace.SMEM),
                  pl.BlockSpec(memory_space=pltpu.MemorySpace.SMEM),
                  pl.BlockSpec(memory_space=pltpu.MemorySpace.SMEM),
                  pl.BlockSpec((1, Cin, th, W), lambda n, t: (n, 0, t, 0))],
        out_specs=pl.BlockSpec((1, Cout, th, W), lambda n, t: (n, 0, t, 0)),
        scratch_shapes=[pltpu.VMEM((Cin, th, W), jnp.float32)],
        compiler_params=pltpu.CompilerParams(
            dimension_semantics=("parallel", "parallel")),
    )(scale, shift, wvec, x)


# ----------------------------------------------------------------------------
# Parameters + forward pass (training-mode BatchNorm, as in the torch module).
# ----------------------------------------------------------------------------
def init_generator_params(key, latent_dim, code_dim, channels, ngf):
    input_dim = latent_dim + code_dim
    cfgs = [(input_dim, 16 * ngf, 4, 1, 0)]
    cfgs += [((16 - 2 * i) * ngf, (14 - 2 * i) * ngf, 4, 2, 1) for i in range(7)]
    blocks = []
    for (cin, cout, K, s, p) in cfgs:
        key, k1, k2, k3 = jax.random.split(key, 4)
        blocks.append(dict(
            w=0.05 * jax.random.normal(k1, (cin, cout, K, K), jnp.float32),
            gamma=1.0 + 0.1 * jax.random.normal(k2, (cout,), jnp.float32),
            beta=0.1 * jax.random.normal(k3, (cout,), jnp.float32),
            stride=s, pad=p))
    key, kf = jax.random.split(key)
    w_final = 0.05 * jax.random.normal(kf, (2 * ngf, channels, 1, 1), jnp.float32)
    return dict(blocks=blocks, w_final=w_final)


def _bn_scale_shift(psum, psq, count, gamma, beta):
    mean = psum / count
    var = psq / count - mean * mean          # biased variance (train-mode BatchNorm)
    scale = gamma / jnp.sqrt(var + BN_EPS)
    shift = beta - mean * scale
    return scale, shift


def generator_forward(noise, code, params):
    blocks = params["blocks"]
    x0 = jnp.concatenate([noise, code], axis=-1).astype(jnp.float32)
    N = x0.shape[0]

    # Block 0: ConvTranspose2d(k=4, s=1, p=0) on a 1x1 map == matmul.
    blk = blocks[0]
    x, psum, psq = fc_conv1_pallas(x0, blk["w"])               # NHWC (N, 4, 4, C)
    scale, shift = _bn_scale_shift(psum, psq, float(N * 16), blk["gamma"], blk["beta"])
    x = affine_relu_nhwc(x, scale, shift)
    layout = "NHWC"

    last_scale = last_shift = None
    for li in range(1, len(blocks)):
        blk = blocks[li]
        Cin, Cout = blk["w"].shape[0], blk["w"].shape[1]
        W_in = x.shape[2] if layout == "NHWC" else x.shape[3]
        lane_dense = (2 * W_in >= 128) and (Cin * Cout <= 128)
        if lane_dense and layout == "NHWC":
            x = jnp.transpose(x, (0, 3, 1, 2))     # one-time layout switch (glue)
            layout = "NCHW"
        elif (not lane_dense) and layout == "NCHW":
            x = jnp.transpose(x, (0, 2, 3, 1))
            layout = "NHWC"

        if layout == "NCHW":
            x, ps, pq = convT_s2_nchw(x, blk["w"])
            _, _, Ho, Wo = x.shape
        else:
            x, ps, pq = convT_s2_nhwc(x, blk["w"])
            _, Ho, Wo, _ = x.shape

        scale, shift = _bn_scale_shift(ps, pq, float(N * Ho * Wo),
                                       blk["gamma"], blk["beta"])
        if li == len(blocks) - 1:
            last_scale, last_shift = scale, shift   # fused into the final kernel
        else:
            if layout == "NCHW":
                x = affine_relu_nchw(x, scale, shift)
            else:
                x = affine_relu_nhwc(x, scale, shift)

    if layout == "NHWC":
        x = jnp.transpose(x, (0, 3, 1, 2))
    # TODO(synk): nn.BatchNorm2d running-mean/var buffer updates are not
    # modeled (they do not affect the training-mode forward output).
    return final_1x1_tanh(x, params["w_final"], last_scale, last_shift)   # NCHW


# ----------------------------------------------------------------------------
# Pure-JAX reference (for correctness check).
# ----------------------------------------------------------------------------
def _ref_conv_transpose(x, w_t, stride, pad):
    K = w_t.shape[2]
    e = K - 1 - pad
    w_conv = jnp.transpose(w_t[:, :, ::-1, ::-1], (2, 3, 0, 1))
    return jax.lax.conv_general_dilated(
        x, w_conv, window_strides=(1, 1), padding=[(e, e), (e, e)],
        lhs_dilation=(stride, stride),
        dimension_numbers=("NHWC", "HWIO", "NHWC"))


def reference_forward(noise, code, params):
    x = jnp.concatenate([noise, code], axis=-1).astype(jnp.float32)[:, None, None, :]
    for blk in params["blocks"]:
        x = _ref_conv_transpose(x, blk["w"], blk["stride"], blk["pad"])
        mean = jnp.mean(x, axis=(0, 1, 2))
        var = jnp.mean((x - mean) ** 2, axis=(0, 1, 2))
        x = (x - mean) / jnp.sqrt(var + BN_EPS) * blk["gamma"] + blk["beta"]
        x = jnp.maximum(x, 0.0)
    x = jnp.tanh(_ref_conv_transpose(x, params["w_final"], 1, 0))
    return jnp.transpose(x, (0, 3, 1, 2))


if __name__ == "__main__":
    latent_dim, code_dim, channels, ngf, batch = 8, 2, 3, 2, 2
    key = jax.random.PRNGKey(0)
    kp, kn, kc = jax.random.split(key, 3)
    params = init_generator_params(kp, latent_dim, code_dim, channels, ngf)
    noise = jax.random.normal(kn, (batch, latent_dim), jnp.float32)
    code = jax.random.normal(kc, (batch, code_dim), jnp.float32)

    img = jax.block_until_ready(generator_forward(noise, code, params))
    assert img.shape == (batch, channels, 512, 512), img.shape

    ref = jax.block_until_ready(reference_forward(noise, code, params))
    np.testing.assert_allclose(np.asarray(img), np.asarray(ref),
                               rtol=2e-3, atol=1e-2)
    print("KERNEL_OK")
</pallas_src>

<mosaic_0001>
module attributes {stable_mosaic.version = 11 : i64} {
  func.func @_fc_conv1_kernel(%arg0: i32, %arg1: memref<2x10xf32, #tpu.memory_space<vmem>>, %arg2: memref<10x512xf32, #tpu.memory_space<vmem>>, %arg3: memref<2x512xf32, #tpu.memory_space<vmem>>, %arg4: memref<1x512xf32, #tpu.memory_space<vmem>>, %arg5: memref<1x512xf32, #tpu.memory_space<vmem>>) attributes {dimension_semantics = [#tpu.dimension_semantics<arbitrary>], iteration_bounds = array<i64: 1>, scalar_prefetch = 0 : i64, scratch_operands = 0 : i64, tpu.core_type = #tpu.core_type<tc>, window_params = [{pipeline_mode = #tpu.pipeline_mode<synchronous>, transform_indices = @transform_0, window_bounds = array<i64: 2, 10>}, {pipeline_mode = #tpu.pipeline_mode<synchronous>, transform_indices = @transform_1, window_bounds = array<i64: 10, 512>}, {pipeline_mode = #tpu.pipeline_mode<synchronous>, transform_indices = @transform_2, window_bounds = array<i64: 2, 512>}, {pipeline_mode = #tpu.pipeline_mode<synchronous>, transform_indices = @transform_3, window_bounds = array<i64: 1, 512>}, {pipeline_mode = #tpu.pipeline_mode<synchronous>, transform_indices = @transform_4, window_bounds = array<i64: 1, 512>}]} {
    %c0 = arith.constant 0 : index
    %c0_0 = arith.constant 0 : index
    %0 = vector.load %arg1[%c0, %c0_0] : memref<2x10xf32, #tpu.memory_space<vmem>>, vector<2x10xf32>
    %c0_1 = arith.constant 0 : index
    %c0_2 = arith.constant 0 : index
    %1 = vector.load %arg2[%c0_1, %c0_2] : memref<10x512xf32, #tpu.memory_space<vmem>>, vector<10x512xf32>
    %cst = arith.constant dense<0.000000e+00> : vector<2x512xf32>
    %2 = tpu.matmul %0, %1, %cst {dimension_numbers = #tpu.dot_dimension_numbers<[1], [0], [0], [1], [0, 0, 1, 1], [], []>} : vector<2x10xf32>, vector<10x512xf32>, vector<2x512xf32> -> vector<2x512xf32>
    %c0_3 = arith.constant 0 : index
    %c0_4 = arith.constant 0 : index
    %3 = vector.load %arg3[%c0_3, %c0_4] : memref<2x512xf32, #tpu.memory_space<vmem>>, vector<2x512xf32>
    tpu.vector_store %arg3[%c0_3, %c0_4], %2 {strides = array<i32>} : memref<2x512xf32, #tpu.memory_space<vmem>>, vector<2x512xf32>,
    %cst_5 = arith.constant dense<0.000000e+00> : vector<512xf32>
    %4 = vector.multi_reduction <add>, %2, %cst_5 [0] : vector<2x512xf32> to vector<512xf32>
    %5 = vector.shape_cast %4 : vector<512xf32> to vector<1x512xf32>
    %c0_6 = arith.constant 0 : index
    %c0_7 = arith.constant 0 : index
    %6 = vector.load %arg4[%c0_6, %c0_7] : memref<1x512xf32, #tpu.memory_space<vmem>>, vector<1x512xf32>
    tpu.vector_store %arg4[%c0_6, %c0_7], %5 {strides = array<i32>} : memref<1x512xf32, #tpu.memory_space<vmem>>, vector<1x512xf32>,
    %7 = arith.mulf %2, %2 : vector<2x512xf32>
    %cst_8 = arith.constant dense<0.000000e+00> : vector<512xf32>
    %8 = vector.multi_reduction <add>, %7, %cst_8 [0] : vector<2x512xf32> to vector<512xf32>
    %9 = vector.shape_cast %8 : vector<512xf32> to vector<1x512xf32>
    %c0_9 = arith.constant 0 : index
    %c0_10 = arith.constant 0 : index
    %10 = vector.load %arg5[%c0_9, %c0_10] : memref<1x512xf32, #tpu.memory_space<vmem>>, vector<1x512xf32>
    tpu.vector_store %arg5[%c0_9, %c0_10], %9 {strides = array<i32>} : memref<1x512xf32, #tpu.memory_space<vmem>>, vector<1x512xf32>,
    return
  }
  func.func @transform_0(%arg0: i32) -> (i32, i32) {
    %c0_i32 = arith.constant 0 : i32
    %c0_i32_0 = arith.constant 0 : i32
    %c0_i32_1 = arith.constant 0 : i32
    return %c0_i32, %c0_i32_0 : i32, i32
  }
  func.func @transform_1(%arg0: i32) -> (i32, i32) {
    %c0_i32 = arith.constant 0 : i32
    %c0_i32_0 = arith.constant 0 : i32
    %c0_i32_1 = arith.constant 0 : i32
    return %c0_i32, %c0_i32_0 : i32, i32
  }
  func.func @transform_2(%arg0: i32) -> (i32, i32) {
    %c0_i32 = arith.constant 0 : i32
    %c0_i32_0 = arith.constant 0 : i32
    %c0_i32_1 = arith.constant 0 : i32
    return %c0_i32, %c0_i32_0 : i32, i32
  }
  func.func @transform_3(%arg0: i32) -> (i32, i32) {
    %c0_i32 = arith.constant 0 : i32
    %c0_i32_0 = arith.constant 0 : i32
    %c0_i32_1 = arith.constant 0 : i32
    return %c0_i32, %c0_i32_0 : i32, i32
  }
  func.func @transform_4(%arg0: i32) -> (i32, i32) {
    %c0_i32 = arith.constant 0 : i32
    %c0_i32_0 = arith.constant 0 : i32
    %c0_i32_1 = arith.constant 0 : i32
    return %c0_i32, %c0_i32_0 : i32, i32
  }
}

</mosaic_0001>

<llo_original>
// kernel: tpu_custom_call.1
$region0: #{tpu_custom_call.1}
  #allocation0 [shape = 'u32[]', space=smem, size = 0x4, offset = 0x4, fixed_abs, tag = 'smem constant byte address 0x4 - core index']
  #allocation1 [shape = 'u32[72,128]{1,0:T(1,128)}', space=vmem, size = 0x9000, scoped, tag = 'internal scratch']
  %s0 = inlined_call_operand.hbm [shape: f32[2,10], index: 0, kind: input, shape index: {}]
  %s1 = inlined_call_operand.hbm [shape: f32[10,512], index: 1, kind: input, shape index: {}]
  %s2 = inlined_call_operand.hbm [shape: f32[2,512], index: 2, kind: output, shape index: {0}]
  %s3 = inlined_call_operand.hbm [shape: f32[1,512], index: 3, kind: output, shape index: {1}]
  %s4 = inlined_call_operand.hbm [shape: f32[1,512], index: 4, kind: output, shape index: {2}]
  %5 = xla_tuple %s2, %s3, %s4
  %s6 = sld [smem:[#allocation0]]
  $region42: #{tpu_custom_call.1} parent=0
    _
  %s8 = ssub.s32 1, %s6
  %s9 = scalar_select 0, %s8, %s6
  $region1: #{tpu_custom_call.1} parent=0
    #allocation2 [shape = 'u8[1024]{0}', space=vmem, size = 0x400, scoped, tag = 'input window, operand 0, single buffered']
    #allocation3 [shape = 's32[1]{0}', space=sflag, size = 0x4, scoped, tag = 'scoped memory for tpu_custom_call.1']
    #allocation4 [shape = 's32[1]{0}', space=sflag, size = 0x4, scoped, tag = 'scoped memory for tpu_custom_call.1']
    #allocation5 [shape = 'u8[32768]{0}', space=vmem, size = 0x8000, scoped, tag = 'input window, operand 1, single buffered']
    #allocation6 [shape = 's32[1]{0}', space=sflag, size = 0x4, scoped, tag = 'scoped memory for tpu_custom_call.1']
    #allocation7 [shape = 'u8[4096]{0}', space=vmem, size = 0x1000, scoped, tag = 'output window, operand 0, single buffered']
    #allocation8 [shape = 'u8[2048]{0}', space=vmem, size = 0x800, scoped, tag = 'output window, operand 1, single buffered']
    #allocation9 [shape = 's32[1]{0}', space=sflag, size = 0x4, scoped, tag = 'scoped memory for tpu_custom_call.1']
    #allocation10 [shape = 'u8[2048]{0}', space=vmem, size = 0x800, scoped, tag = 'output window, operand 2, single buffered']
    %10 = vsyncpa [#allocation3], 0
    %11 = vsyncpa [#allocation6], 0
    %12 = vsyncpa [#allocation4], 0
    %13 = vsyncpa [#allocation9], 0
    // Predicated region
    $region2: #{tpu_custom_call.1} parent=1 // pred_check
      _
    $region3: #{tpu_custom_call.1} parent=1 // pred_check_branch
      %15 = sbr.rel (0) target = $region5
    $region4: #{tpu_custom_call.1} parent=1 // pred_region
      %17 = vsyncadd [#allocation3], 0
      %s19 = sshll.u32 %s0, 4
      %s20 = int_to_ptr.hbm [resolvable:$true] %s19
      %s21 = sshll.u32 [#allocation2], 4
      %s22 = int_to_ptr.vmem [resolvable:$true] %s21
      %24 = dma.hbm_to_vmem [thread:$0]  %s20, 32, %s22, [#allocation3]
    $region5: #{tpu_custom_call.1} parent=1 // pred_fallthru
      _
    // Predicated region
    $region6: #{tpu_custom_call.1} parent=1 // pred_check
      _
    $region7: #{tpu_custom_call.1} parent=1 // pred_check_branch
      %26 = sbr.rel (0) target = $region9
    $region8: #{tpu_custom_call.1} parent=1 // pred_region
      %28 = vsyncadd [#allocation6], 0
      %s29 = sshll.u32 %s1, 4
      %s30 = int_to_ptr.hbm [resolvable:$true] %s29
      %s31 = sshll.u32 [#allocation5], 4
      %s32 = int_to_ptr.vmem [resolvable:$true] %s31
      %37 = dma.hbm_to_vmem [thread:$0]  %s30, 1024, %s32, [#allocation6], 512, 512, 32
    $region9: #{tpu_custom_call.1} parent=1 // pred_fallthru
      _
    // Predicated region
    $region10: #{tpu_custom_call.1} parent=1 // pred_check
      _
    $region11: #{tpu_custom_call.1} parent=1 // pred_check_branch
      %39 = sbr.rel (0) target = $region13
    $region12: #{tpu_custom_call.1} parent=1 // pred_region
      %41 = dma.done [#allocation3], 32
    $region13: #{tpu_custom_call.1} parent=1 // pred_fallthru
      _
    // Predicated region
    $region14: #{tpu_custom_call.1} parent=1 // pred_check
      _
    $region15: #{tpu_custom_call.1} parent=1 // pred_check_branch
      %43 = sbr.rel (0) target = $region17
    $region16: #{tpu_custom_call.1} parent=1 // pred_region
      %45 = dma.done [#allocation6], 1024
    $region17: #{tpu_custom_call.1} parent=1 // pred_fallthru
      _
    %v46 = vld [vmem:[#allocation2] sm:$0x3]
    %v47 = vld [vmem:[#allocation5] sm:$0xff]
    %v48 = vld [vmem:[#allocation5 + $0x8] sm:$0xff]
    %v49 = vld [vmem:[#allocation5 + $0x10] sm:$0xff]
    %v50 = vld [vmem:[#allocation5 + $0x18] sm:$0xff]
    %v51 = vld [vmem:[#allocation5 + $0x20] sm:$0x3]
    %v52 = vld [vmem:[#allocation5 + $0x28] sm:$0x3]
    %v53 = vld [vmem:[#allocation5 + $0x30] sm:$0x3]
    %v54 = vld [vmem:[#allocation5 + $0x38] sm:$0x3]
    %vm55 = vcmask 80896
    %v57 = vsel %vm55, %v46, 0
    %vm59 = vcmask 1041408
    %v61 = vsel %vm59, %v51, 0
    %v64 = vsel %vm59, %v52, 0
    %v67 = vsel %vm59, %v53, 0
    %v70 = vsel %vm59, %v54, 0
    %72 = vmatpush.msra.mxu0 0.0
    %73 = vmatpush.msra.mxu0 0.0
    %74 = vmatpush.msra.mxu0 0.0
    %75 = vmatpush.msra.mxu0 0.0
    %76 = vmatpush.msra.mxu0 0.0
    %77 = vmatpush.msra.mxu0 0.0
    %78 = vmatpush.msra.mxu0 0.0
    %79 = vmatpush.msra.mxu0 0.0
    %80 = vmatpush.msra.mxu0 0.0
    %81 = vmatpush.msra.mxu0 0.0
    %82 = vmatpush.msra.mxu0 0.0
    %83 = vmatpush.msra.mxu0 0.0
    %84 = vmatpush.msra.mxu0 0.0
    %85 = vmatpush.msra.mxu0 0.0
    %86 = vmatpush.msra.mxu0 %v61
    %87 = vmatpush.msra.mxu0 %v47
    %88 = vmatmul.f32.gmra.mxu0 %v57
    %v89 = vpop.f32.mrf.mxu0
    %v90 = vadd.f32 0.0, %v89
    %91 = vdwg.mxu0
    %92 = vmatpush.msra.mxu0 0.0
    %93 = vmatpush.msra.mxu0 0.0
    %94 = vmatpush.msra.mxu0 0.0
    %95 = vmatpush.msra.mxu0 0.0
    %96 = vmatpush.msra.mxu0 0.0
    %97 = vmatpush.msra.mxu0 0.0
    %98 = vmatpush.msra.mxu0 0.0
    %99 = vmatpush.msra.mxu0 0.0
    %100 = vmatpush.msra.mxu0 0.0
    %101 = vmatpush.msra.mxu0 0.0
    %102 = vmatpush.msra.mxu0 0.0
    %103 = vmatpush.msra.mxu0 0.0
    %104 = vmatpush.msra.mxu0 0.0
    %105 = vmatpush.msra.mxu0 0.0
    %106 = vmatpush.msra.mxu0 %v64
    %107 = vmatpush.msra.mxu0 %v48
    %108 = vmatmul.f32.gmra.mxu0 %v57
    %v109 = vpop.f32.mrf.mxu0
    %v110 = vadd.f32 0.0, %v109
    %111 = vdwg.mxu0
    %112 = vmatpush.msra.mxu0 0.0
    %113 = vmatpush.msra.mxu0 0.0
    %114 = vmatpush.msra.mxu0 0.0
    %115 = vmatpush.msra.mxu0 0.0
    %116 = vmatpush.msra.mxu0 0.0
    %117 = vmatpush.msra.mxu0 0.0
    %118 = vmatpush.msra.mxu0 0.0
    %119 = vmatpush.msra.mxu0 0.0
    %120 = vmatpush.msra.mxu0 0.0
    %121 = vmatpush.msra.mxu0 0.0
    %122 = vmatpush.msra.mxu0 0.0
    %123 = vmatpush.msra.mxu0 0.0
    %124 = vmatpush.msra.mxu0 0.0
    %125 = vmatpush.msra.mxu0 0.0
    %126 = vmatpush.msra.mxu0 %v67
    %127 = vmatpush.msra.mxu0 %v49
    %128 = vmatmul.f32.gmra.mxu0 %v57
    %v129 = vpop.f32.mrf.mxu0
    %v130 = vadd.f32 0.0, %v129
    %131 = vdwg.mxu0
    %132 = vmatpush.msra.mxu0 0.0
    %133 = vmatpush.msra.mxu0 0.0
    %134 = vmatpush.msra.mxu0 0.0
    %135 = vmatpush.msra.mxu0 0.0
    %136 = vmatpush.msra.mxu0 0.0
    %137 = vmatpush.msra.mxu0 0.0
    %138 = vmatpush.msra.mxu0 0.0
    %139 = vmatpush.msra.mxu0 0.0
    %140 = vmatpush.msra.mxu0 0.0
    %141 = vmatpush.msra.mxu0 0.0
    %142 = vmatpush.msra.mxu0 0.0
    %143 = vmatpush.msra.mxu0 0.0
    %144 = vmatpush.msra.mxu0 0.0
    %145 = vmatpush.msra.mxu0 0.0
    %146 = vmatpush.msra.mxu0 %v70
    %147 = vmatpush.msra.mxu0 %v50
    %148 = vmatmul.f32.gmra.mxu0 %v57
    %v149 = vpop.f32.mrf.mxu0
    %v150 = vadd.f32 0.0, %v149
    %151 = vdwg.mxu0
    %v156 = vrot.slane %v110, 6
    %v157 = vrot.slane %v130, 4
    %v158 = vrot.slane %v150, 2
    %v159 = vsel %vm59, %v90, %v156
    %vm160 = vcmask 1045508
    %v161 = vsel %vm160, %v157, %v158
    %vm162 = vcmask 1043456
    %v163 = vsel %vm162, %v159, %v161
    %165 = vst [vmem:[#allocation7] sm:$0xff] %v163
    %v166 = vsel %vm59, %v90, 0.0
    %v167 = vrot.slane %v166, 4
    %v168 = vadd.f32 %v166, %v167
    %v169 = vrot.slane %v168, 2
    %v170 = vadd.f32 %v168, %v169
    %v171 = vrot.slane %v170, 1
    %v172 = vadd.f32 %v170, %v171
    %v173 = vsel %vm59, %v110, 0.0
    %v174 = vrot.slane %v173, 4
    %v175 = vadd.f32 %v173, %v174
    %v176 = vrot.slane %v175, 2
    %v177 = vadd.f32 %v175, %v176
    %v178 = vrot.slane %v177, 1
    %v179 = vadd.f32 %v177, %v178
    %v180 = vsel %vm59, %v130, 0.0
    %v181 = vrot.slane %v180, 4
    %v182 = vadd.f32 %v180, %v181
    %v183 = vrot.slane %v182, 2
    %v184 = vadd.f32 %v182, %v183
    %v185 = vrot.slane %v184, 1
    %v186 = vadd.f32 %v184, %v185
    %v187 = vsel %vm59, %v150, 0.0
    %v188 = vrot.slane %v187, 4
    %v189 = vadd.f32 %v187, %v188
    %v190 = vrot.slane %v189, 2
    %v191 = vadd.f32 %v189, %v190
    %v192 = vrot.slane %v191, 1
    %v193 = vadd.f32 %v191, %v192
    %v198 = vrot.slane %v179, 7
    %v199 = vrot.slane %v186, 6
    %v200 = vrot.slane %v193, 5
    %vm201 = vcmask 1040384
    %v202 = vsel %vm201, %v172, %v198
    %vm203 = vcmask 1042434
    %v204 = vsel %vm203, %v199, %v200
    %v205 = vsel %vm59, %v202, %v204
    %v207 = vlaneseq
    %vm208 = vcmp.ge.s32.totalorder %v207, 0
    %vm209 = vcmp.lt.s32.totalorder %v207, 512
    %vm210 = vmand %vm208, %vm209
    %211 = vst.msk [vmem:[#allocation8] sm:$0xf] %vm210, %v205
    %v212 = vmul.f32 %v90, %v90
    %v213 = vmul.f32 %v110, %v110
    %v214 = vmul.f32 %v130, %v130
    %v215 = vmul.f32 %v150, %v150
    %v216 = vsel %vm59, %v212, 0.0
    %v217 = vrot.slane %v216, 4
    %v218 = vadd.f32 %v216, %v217
    %v219 = vrot.slane %v218, 2
    %v220 = vadd.f32 %v218, %v219
    %v221 = vrot.slane %v220, 1
    %v222 = vadd.f32 %v220, %v221
    %v223 = vsel %vm59, %v213, 0.0
    %v224 = vrot.slane %v223, 4
    %v225 = vadd.f32 %v223, %v224
    %v226 = vrot.slane %v225, 2
    %v227 = vadd.f32 %v225, %v226
    %v228 = vrot.slane %v227, 1
    %v229 = vadd.f32 %v227, %v228
    %v230 = vsel %vm59, %v214, 0.0
    %v231 = vrot.slane %v230, 4
    %v232 = vadd.f32 %v230, %v231
    %v233 = vrot.slane %v232, 2
    %v234 = vadd.f32 %v232, %v233
    %v235 = vrot.slane %v234, 1
    %v236 = vadd.f32 %v234, %v235
    %v237 = vsel %vm59, %v215, 0.0
    %v238 = vrot.slane %v237, 4
    %v239 = vadd.f32 %v237, %v238
    %v240 = vrot.slane %v239, 2
    %v241 = vadd.f32 %v239, %v240
    %v242 = vrot.slane %v241, 1
    %v243 = vadd.f32 %v241, %v242
    %v248 = vrot.slane %v229, 7
    %v249 = vrot.slane %v236, 6
    %v250 = vrot.slane %v243, 5
    %v251 = vsel %vm201, %v222, %v248
    %v252 = vsel %vm203, %v249, %v250
    %v253 = vsel %vm59, %v251, %v252
    %255 = vst.msk [vmem:[#allocation10] sm:$0xf] %vm210, %v253
    // Predicated region
    $region18: #{tpu_custom_call.1} parent=1 // pred_check
      _
    $region19: #{tpu_custom_call.1} parent=1 // pred_check_branch
      %257 = sbr.rel (0) target = $region21
    $region20: #{tpu_custom_call.1} parent=1 // pred_region
      %259 = vsyncadd [#allocation4], 0
      %s261 = sshll.u32 [#allocation7], 4
      %s262 = int_to_ptr.vmem [resolvable:$true] %s261
      %s263 = sshll.u32 %s2, 4
      %s264 = int_to_ptr.hbm [resolvable:$true] %s263
      %266 = dma.vmem_to_hbm [thread:$0]  %s262, 128, %s264, [#allocation4]
    $region21: #{tpu_custom_call.1} parent=1 // pred_fallthru
      _
    // Predicated region
    $region22: #{tpu_custom_call.1} parent=1 // pred_check
      _
    $region23: #{tpu_custom_call.1} parent=1 // pred_check_branch
      %268 = sbr.rel (0) target = $region25
    $region24: #{tpu_custom_call.1} parent=1 // pred_region
      %270 = vsyncadd [#allocation9], 0
      %s272 = sshll.u32 [#allocation8], 4
      %s273 = int_to_ptr.vmem [resolvable:$true] %s272
      %s274 = sshll.u32 %s3, 4
      %s275 = int_to_ptr.hbm [resolvable:$true] %s274
      %277 = dma.vmem_to_hbm [thread:$0]  %s273, 64, %s275, [#allocation9]
    $region25: #{tpu_custom_call.1} parent=1 // pred_fallthru
      _
    // Predicated region
    $region26: #{tpu_custom_call.1} parent=1 // pred_check
      _
    $region27: #{tpu_custom_call.1} parent=1 // pred_check_branch
      %279 = sbr.rel (0) target = $region29
    $region28: #{tpu_custom_call.1} parent=1 // pred_region
      %281 = vsyncadd [#allocation9], 0
      %s283 = sshll.u32 [#allocation10], 4
      %s284 = int_to_ptr.vmem [resolvable:$true] %s283
      %s285 = sshll.u32 %s4, 4
      %s286 = int_to_ptr.hbm [resolvable:$true] %s285
      %288 = dma.vmem_to_hbm [thread:$0]  %s284, 64, %s286, [#allocation9]
    $region29: #{tpu_custom_call.1} parent=1 // pred_fallthru
      _
    // Predicated region
    $region30: #{tpu_custom_call.1} parent=1 // pred_check
      _
    $region31: #{tpu_custom_call.1} parent=1 // pred_check_branch
      %290 = sbr.rel (0) target = $region33
    $region32: #{tpu_custom_call.1} parent=1 // pred_region
      %292 = dma.done [#allocation4], 128
    $region33: #{tpu_custom_call.1} parent=1 // pred_fallthru
      _
    // Predicated region
    $region34: #{tpu_custom_call.1} parent=1 // pred_check
      _
    $region35: #{tpu_custom_call.1} parent=1 // pred_check_branch
      %294 = sbr.rel (0) target = $region37
    $region36: #{tpu_custom_call.1} parent=1 // pred_region
      %296 = dma.done [#allocation9], 64
    $region37: #{tpu_custom_call.1} parent=1 // pred_fallthru
      _
    // Predicated region
    $region38: #{tpu_custom_call.1} parent=1 // pred_check
      _
    $region39: #{tpu_custom_call.1} parent=1 // pred_check_branch
      %298 = sbr.rel (0) target = $region41
    $region40: #{tpu_custom_call.1} parent=1 // pred_region
      %300 = dma.done [#allocation9], 64
    $region41: #{tpu_custom_call.1} parent=1 // pred_fallthru
      _
    %301 = vsyncpa [#allocation3], 1
    %302 = vsyncpa [#allocation6], 1
    %303 = vsyncpa [#allocation4], 1
    %304 = vsyncpa [#allocation9], 1

</llo_original>
